<compile_context>
chip_gen: v7x
topology: tpu7x:2x2x1
jax: 0.10.0
libtpu: 0.0.40
codegen_flags: <defaults>
</compile_context>

<pallas_src>
import jax
import jax.numpy as jnp
from jax.experimental import pallas as pl
from jax.experimental.pallas import tpu as pltpu

H1 = 16       # branch first-Linear width
H2 = 32       # branch second-Linear width
CAT = 2 * H2  # 64 = concat width fed to the tower
OUT = 32      # tower output width


def _complex_module_kernel(x1_ref, x2_ref,
                           w1a_ref, w1b_ref, b1_ref,
                           w2_ref, b2_ref,
                           wt_ref, bt_ref,
                           o_ref):
    f32 = jnp.float32

    # Layer 1 of both branches fused into one 32-wide hidden:
    #   lanes [0:16)  = x1 @ w11.T + b11   (branch 1)
    #   lanes [16:32) = x2 @ w21.T + b21   (branch 2)
    # Placement into disjoint lane ranges comes from the zero-padded weights
    # built host-side -> no in-kernel concat / lane shuffles.
    h = jnp.dot(x1_ref[...], w1a_ref[...], preferred_element_type=f32)
    h = h + jnp.dot(x2_ref[...], w1b_ref[...], preferred_element_type=f32)
    h = jnp.maximum(h + b1_ref[...], 0.0)

    # Layer 2: block-diagonal (32 -> 64);
    #   lanes [0:32) = out_one, lanes [32:64) = out_two  (torch concat order)
    o = jnp.dot(h, w2_ref[...], preferred_element_type=f32)
    o = jnp.maximum(o + b2_ref[...], 0.0)

    # Tower: (64 -> 32) + ReLU
    y = jnp.dot(o, wt_ref[...], preferred_element_type=f32)
    y = jnp.maximum(y + bt_ref[...], 0.0)
    o_ref[...] = y.astype(o_ref.dtype)


def prepare_fused_params(p):
    """One-time host-side layout work: transpose to (in, out), zero-pad /
    block-diagonalize so the kernel needs no transposes, slices or concats."""
    f32 = jnp.float32
    in1 = p["w11"].shape[1]
    in2 = p["w21"].shape[1]
    # Branch layer-1 weights, each mapping into its own half of a 32-wide hidden.
    w1a = jnp.zeros((in1, 2 * H1), f32).at[:, :H1].set(p["w11"].T)
    w1b = jnp.zeros((in2, 2 * H1), f32).at[:, H1:].set(p["w21"].T)
    b1 = jnp.concatenate([p["b11"], p["b21"]]).reshape(1, 2 * H1).astype(f32)
    # Branch layer-2 weights as one block-diagonal (32, 64) matrix.
    w2 = (jnp.zeros((2 * H1, CAT), f32)
          .at[:H1, :H2].set(p["w12"].T)
          .at[H1:, H2:].set(p["w22"].T))
    b2 = jnp.concatenate([p["b12"], p["b22"]]).reshape(1, CAT).astype(f32)
    # Tower weight pre-transposed to (64, 32).
    wt = p["wt"].T.astype(f32)
    bt = p["bt"].reshape(1, OUT).astype(f32)
    return (w1a, w1b, b1, w2, b2, wt, bt)


def complex_module_forward(inp_one, inp_two, fused, *, block_batch=2048):
    batch, in1 = inp_one.shape
    in2 = inp_two.shape[1]
    # Large batch tile for DMA/compute overlap; full-array block when batch is small.
    tb = batch if batch <= block_batch else block_batch
    grid = (pl.cdiv(batch, tb),)

    def row_spec(feat):
        return pl.BlockSpec((tb, feat), lambda i: (i, 0))

    def const_spec(arr):
        # Weights/biases: same block every grid step -> stay VMEM-resident.
        return pl.BlockSpec(arr.shape, lambda i: (0, 0))

    w1a, w1b, b1, w2, b2, wt, bt = fused

    flops = 2 * batch * (in1 * 2 * H1 + in2 * 2 * H1 + 2 * H1 * CAT + CAT * OUT)
    param_bytes = 4 * sum(a.size for a in fused)
    bytes_accessed = 4 * batch * (in1 + in2 + OUT) + param_bytes

    return pl.pallas_call(
        _complex_module_kernel,
        out_shape=jax.ShapeDtypeStruct((batch, OUT), jnp.float32),
        grid=grid,
        in_specs=[
            row_spec(in1), row_spec(in2),
            const_spec(w1a), const_spec(w1b), const_spec(b1),
            const_spec(w2), const_spec(b2),
            const_spec(wt), const_spec(bt),
        ],
        out_specs=pl.BlockSpec((tb, OUT), lambda i: (i, 0)),
        compiler_params=pltpu.CompilerParams(
            dimension_semantics=("parallel",)),
        cost_estimate=pl.CostEstimate(
            flops=flops, transcendentals=0, bytes_accessed=bytes_accessed),
    )(inp_one, inp_two, *fused)


def init_params(key, input_size_one, input_size_two):
    ks = jax.random.split(key, 10)

    def lin(kw, kb, out_f, in_f):
        bound = 1.0 / jnp.sqrt(in_f)
        w = jax.random.uniform(kw, (out_f, in_f), jnp.float32, -bound, bound)
        b = jax.random.uniform(kb, (out_f,), jnp.float32, -bound, bound)
        return w, b

    w11, b11 = lin(ks[0], ks[1], H1, input_size_one)
    w12, b12 = lin(ks[2], ks[3], H2, H1)
    w21, b21 = lin(ks[4], ks[5], H1, input_size_two)
    w22, b22 = lin(ks[6], ks[7], H2, H1)
    wt, bt = lin(ks[8], ks[9], OUT, CAT)
    return dict(w11=w11, b11=b11, w12=w12, b12=b12,
                w21=w21, b21=b21, w22=w22, b22=b22,
                wt=wt, bt=bt)


def reference_forward(inp_one, inp_two, p):
    relu = lambda x: jnp.maximum(x, 0.0)
    o1 = relu(relu(inp_one @ p["w11"].T + p["b11"]) @ p["w12"].T + p["b12"])
    o2 = relu(relu(inp_two @ p["w21"].T + p["b21"]) @ p["w22"].T + p["b22"])
    cat = jnp.concatenate([o1, o2], axis=1)
    return relu(cat @ p["wt"].T + p["bt"])


if __name__ == "__main__":
    batch = 2
    input_size_one = 8
    input_size_two = 12

    key = jax.random.PRNGKey(0)
    k1, k2, kp = jax.random.split(key, 3)
    inp_one = jax.random.normal(k1, (batch, input_size_one), jnp.float32)
    inp_two = jax.random.normal(k2, (batch, input_size_two), jnp.float32)
    params = init_params(kp, input_size_one, input_size_two)
    fused = prepare_fused_params(params)

    out = complex_module_forward(inp_one, inp_two, fused)
    out = jax.block_until_ready(out)

    ref = reference_forward(inp_one, inp_two, params)
    assert out.shape == (batch, OUT)
    assert jnp.allclose(out, ref, atol=1e-5, rtol=1e-5)

    print("KERNEL_OK")
</pallas_src>

<mosaic_0001>
module attributes {stable_mosaic.version = 11 : i64} {
  func.func @_complex_module_kernel(%arg0: i32, %arg1: memref<2x8xf32, #tpu.memory_space<vmem>>, %arg2: memref<2x12xf32, #tpu.memory_space<vmem>>, %arg3: memref<8x32xf32, #tpu.memory_space<vmem>>, %arg4: memref<12x32xf32, #tpu.memory_space<vmem>>, %arg5: memref<1x32xf32, #tpu.memory_space<vmem>>, %arg6: memref<32x64xf32, #tpu.memory_space<vmem>>, %arg7: memref<1x64xf32, #tpu.memory_space<vmem>>, %arg8: memref<64x32xf32, #tpu.memory_space<vmem>>, %arg9: memref<1x32xf32, #tpu.memory_space<vmem>>, %arg10: memref<2x32xf32, #tpu.memory_space<vmem>>) attributes {dimension_semantics = [#tpu.dimension_semantics<parallel>], iteration_bounds = array<i64: 1>, scalar_prefetch = 0 : i64, scratch_operands = 0 : i64, tpu.core_type = #tpu.core_type<tc>, window_params = [{transform_indices = @transform_0, window_bounds = array<i64: 2, 8>}, {transform_indices = @transform_1, window_bounds = array<i64: 2, 12>}, {pipeline_mode = #tpu.pipeline_mode<synchronous>, transform_indices = @transform_2, window_bounds = array<i64: 8, 32>}, {pipeline_mode = #tpu.pipeline_mode<synchronous>, transform_indices = @transform_3, window_bounds = array<i64: 12, 32>}, {pipeline_mode = #tpu.pipeline_mode<synchronous>, transform_indices = @transform_4, window_bounds = array<i64: 1, 32>}, {pipeline_mode = #tpu.pipeline_mode<synchronous>, transform_indices = @transform_5, window_bounds = array<i64: 32, 64>}, {pipeline_mode = #tpu.pipeline_mode<synchronous>, transform_indices = @transform_6, window_bounds = array<i64: 1, 64>}, {pipeline_mode = #tpu.pipeline_mode<synchronous>, transform_indices = @transform_7, window_bounds = array<i64: 64, 32>}, {pipeline_mode = #tpu.pipeline_mode<synchronous>, transform_indices = @transform_8, window_bounds = array<i64: 1, 32>}, {transform_indices = @transform_9, window_bounds = array<i64: 2, 32>}]} {
    %c0 = arith.constant 0 : index
    %c0_0 = arith.constant 0 : index
    %0 = vector.load %arg1[%c0, %c0_0] : memref<2x8xf32, #tpu.memory_space<vmem>>, vector<2x8xf32>
    %c0_1 = arith.constant 0 : index
    %c0_2 = arith.constant 0 : index
    %1 = vector.load %arg3[%c0_1, %c0_2] : memref<8x32xf32, #tpu.memory_space<vmem>>, vector<8x32xf32>
    %cst = arith.constant dense<0.000000e+00> : vector<2x32xf32>
    %2 = tpu.matmul %0, %1, %cst {dimension_numbers = #tpu.dot_dimension_numbers<[1], [0], [0], [1], [0, 0, 1, 1], [], []>} : vector<2x8xf32>, vector<8x32xf32>, vector<2x32xf32> -> vector<2x32xf32>
    %c0_3 = arith.constant 0 : index
    %c0_4 = arith.constant 0 : index
    %3 = vector.load %arg2[%c0_3, %c0_4] : memref<2x12xf32, #tpu.memory_space<vmem>>, vector<2x12xf32>
    %c0_5 = arith.constant 0 : index
    %c0_6 = arith.constant 0 : index
    %4 = vector.load %arg4[%c0_5, %c0_6] : memref<12x32xf32, #tpu.memory_space<vmem>>, vector<12x32xf32>
    %cst_7 = arith.constant dense<0.000000e+00> : vector<2x32xf32>
    %5 = tpu.matmul %3, %4, %cst_7 {dimension_numbers = #tpu.dot_dimension_numbers<[1], [0], [0], [1], [0, 0, 1, 1], [], []>} : vector<2x12xf32>, vector<12x32xf32>, vector<2x32xf32> -> vector<2x32xf32>
    %6 = arith.addf %2, %5 : vector<2x32xf32>
    %c0_8 = arith.constant 0 : index
    %c0_9 = arith.constant 0 : index
    %7 = vector.load %arg5[%c0_8, %c0_9] : memref<1x32xf32, #tpu.memory_space<vmem>>, vector<1x32xf32>
    %8 = vector.broadcast %7 : vector<1x32xf32> to vector<2x32xf32>
    %9 = arith.addf %6, %8 : vector<2x32xf32>
    %cst_10 = arith.constant 0.000000e+00 : f32
    %10 = vector.broadcast %cst_10 : f32 to vector<2x32xf32>
    %11 = arith.maximumf %9, %10 : vector<2x32xf32>
    %c0_11 = arith.constant 0 : index
    %c0_12 = arith.constant 0 : index
    %12 = vector.load %arg6[%c0_11, %c0_12] : memref<32x64xf32, #tpu.memory_space<vmem>>, vector<32x64xf32>
    %cst_13 = arith.constant dense<0.000000e+00> : vector<2x64xf32>
    %13 = tpu.matmul %11, %12, %cst_13 {dimension_numbers = #tpu.dot_dimension_numbers<[1], [0], [0], [1], [0, 0, 1, 1], [], []>} : vector<2x32xf32>, vector<32x64xf32>, vector<2x64xf32> -> vector<2x64xf32>
    %c0_14 = arith.constant 0 : index
    %c0_15 = arith.constant 0 : index
    %14 = vector.load %arg7[%c0_14, %c0_15] : memref<1x64xf32, #tpu.memory_space<vmem>>, vector<1x64xf32>
    %15 = vector.broadcast %14 : vector<1x64xf32> to vector<2x64xf32>
    %16 = arith.addf %13, %15 : vector<2x64xf32>
    %cst_16 = arith.constant 0.000000e+00 : f32
    %17 = vector.broadcast %cst_16 : f32 to vector<2x64xf32>
    %18 = arith.maximumf %16, %17 : vector<2x64xf32>
    %c0_17 = arith.constant 0 : index
    %c0_18 = arith.constant 0 : index
    %19 = vector.load %arg8[%c0_17, %c0_18] : memref<64x32xf32, #tpu.memory_space<vmem>>, vector<64x32xf32>
    %cst_19 = arith.constant dense<0.000000e+00> : vector<2x32xf32>
    %20 = tpu.matmul %18, %19, %cst_19 {dimension_numbers = #tpu.dot_dimension_numbers<[1], [0], [0], [1], [0, 0, 1, 1], [], []>} : vector<2x64xf32>, vector<64x32xf32>, vector<2x32xf32> -> vector<2x32xf32>
    %c0_20 = arith.constant 0 : index
    %c0_21 = arith.constant 0 : index
    %21 = vector.load %arg9[%c0_20, %c0_21] : memref<1x32xf32, #tpu.memory_space<vmem>>, vector<1x32xf32>
    %22 = vector.broadcast %21 : vector<1x32xf32> to vector<2x32xf32>
    %23 = arith.addf %20, %22 : vector<2x32xf32>
    %cst_22 = arith.constant 0.000000e+00 : f32
    %24 = vector.broadcast %cst_22 : f32 to vector<2x32xf32>
    %25 = arith.maximumf %23, %24 : vector<2x32xf32>
    %c0_23 = arith.constant 0 : index
    %c0_24 = arith.constant 0 : index
    %26 = vector.load %arg10[%c0_23, %c0_24] : memref<2x32xf32, #tpu.memory_space<vmem>>, vector<2x32xf32>
    tpu.vector_store %arg10[%c0_23, %c0_24], %25 {strides = array<i32>} : memref<2x32xf32, #tpu.memory_space<vmem>>, vector<2x32xf32>,
    return
  }
  func.func @transform_0(%arg0: i32) -> (i32, i32) {
    %c0_i32 = arith.constant 0 : i32
    %c0_i32_0 = arith.constant 0 : i32
    return %arg0, %c0_i32 : i32, i32
  }
  func.func @transform_1(%arg0: i32) -> (i32, i32) {
    %c0_i32 = arith.constant 0 : i32
    %c0_i32_0 = arith.constant 0 : i32
    return %arg0, %c0_i32 : i32, i32
  }
  func.func @transform_2(%arg0: i32) -> (i32, i32) {
    %c0_i32 = arith.constant 0 : i32
    %c0_i32_0 = arith.constant 0 : i32
    %c0_i32_1 = arith.constant 0 : i32
    return %c0_i32, %c0_i32_0 : i32, i32
  }
  func.func @transform_3(%arg0: i32) -> (i32, i32) {
    %c0_i32 = arith.constant 0 : i32
    %c0_i32_0 = arith.constant 0 : i32
    %c0_i32_1 = arith.constant 0 : i32
    return %c0_i32, %c0_i32_0 : i32, i32
  }
  func.func @transform_4(%arg0: i32) -> (i32, i32) {
    %c0_i32 = arith.constant 0 : i32
    %c0_i32_0 = arith.constant 0 : i32
    %c0_i32_1 = arith.constant 0 : i32
    return %c0_i32, %c0_i32_0 : i32, i32
  }
  func.func @transform_5(%arg0: i32) -> (i32, i32) {
    %c0_i32 = arith.constant 0 : i32
    %c0_i32_0 = arith.constant 0 : i32
    %c0_i32_1 = arith.constant 0 : i32
    return %c0_i32, %c0_i32_0 : i32, i32
  }
  func.func @transform_6(%arg0: i32) -> (i32, i32) {
    %c0_i32 = arith.constant 0 : i32
    %c0_i32_0 = arith.constant 0 : i32
    %c0_i32_1 = arith.constant 0 : i32
    return %c0_i32, %c0_i32_0 : i32, i32
  }
  func.func @transform_7(%arg0: i32) -> (i32, i32) {
    %c0_i32 = arith.constant 0 : i32
    %c0_i32_0 = arith.constant 0 : i32
    %c0_i32_1 = arith.constant 0 : i32
    return %c0_i32, %c0_i32_0 : i32, i32
  }
  func.func @transform_8(%arg0: i32) -> (i32, i32) {
    %c0_i32 = arith.constant 0 : i32
    %c0_i32_0 = arith.constant 0 : i32
    %c0_i32_1 = arith.constant 0 : i32
    return %c0_i32, %c0_i32_0 : i32, i32
  }
  func.func @transform_9(%arg0: i32) -> (i32, i32) {
    %c0_i32 = arith.constant 0 : i32
    %c0_i32_0 = arith.constant 0 : i32
    return %arg0, %c0_i32 : i32, i32
  }
}

</mosaic_0001>

<llo_original>
// kernel: tpu_custom_call.1
$region0: #{tpu_custom_call.1}
  #allocation0 [shape = 'u32[]', space=smem, size = 0x4, offset = 0x4, fixed_abs, tag = 'smem constant byte address 0x4 - core index']
  #allocation1 [shape = 'u32[144,128]{1,0:T(1,128)}', space=vmem, size = 0x12000, scoped, tag = 'internal scratch']
  %s0 = inlined_call_operand.vmem [shape: f32[2,8], index: 0, kind: input, shape index: {}]
  %s1 = inlined_call_operand.vmem [shape: f32[2,12], index: 1, kind: input, shape index: {}]
  %s2 = inlined_call_operand.vmem [shape: f32[8,32], index: 2, kind: input, shape index: {}]
  %s3 = inlined_call_operand.vmem [shape: f32[12,32], index: 3, kind: input, shape index: {}]
  %s4 = inlined_call_operand.vmem [shape: f32[1,32], index: 4, kind: input, shape index: {}]
  %s5 = inlined_call_operand.vmem [shape: f32[32,64], index: 5, kind: input, shape index: {}]
  %s6 = inlined_call_operand.vmem [shape: f32[1,64], index: 6, kind: input, shape index: {}]
  %s7 = inlined_call_operand.vmem [shape: f32[64,32], index: 7, kind: input, shape index: {}]
  %s8 = inlined_call_operand.vmem [shape: f32[1,32], index: 8, kind: input, shape index: {}]
  %s9 = inlined_call_operand.hbm [shape: f32[2,32], index: 9, kind: output, shape index: {}]
  %s10 = sld [smem:[#allocation0]]
  $region46: #{tpu_custom_call.1} parent=0
    _
  %s12 = ssub.s32 1, %s10
  %s13 = scalar_select 0, %s12, %s10
  $region1: #{tpu_custom_call.1} parent=0
    #allocation2 [shape = 'u8[1024]{0}', space=vmem, size = 0x400, scoped, tag = 'output window, operand 0, single buffered']
    #allocation3 [shape = 's32[1]{0}', space=sflag, size = 0x4, scoped, tag = 'scoped memory for tpu_custom_call.1']
    %14 = vsyncpa [#allocation3], 0
    // Predicated region
    $region2: #{tpu_custom_call.1} parent=1 // pred_check
      _
    $region3: #{tpu_custom_call.1} parent=1 // pred_check_branch
      %16 = sbr.rel (0) target = $region5
    $region4: #{tpu_custom_call.1} parent=1 // pred_region
      _
    $region5: #{tpu_custom_call.1} parent=1 // pred_fallthru
      _
    // Predicated region
    $region6: #{tpu_custom_call.1} parent=1 // pred_check
      _
    $region7: #{tpu_custom_call.1} parent=1 // pred_check_branch
      %18 = sbr.rel (0) target = $region9
    $region8: #{tpu_custom_call.1} parent=1 // pred_region
      _
    $region9: #{tpu_custom_call.1} parent=1 // pred_fallthru
      _
    // Predicated region
    $region10: #{tpu_custom_call.1} parent=1 // pred_check
      _
    $region11: #{tpu_custom_call.1} parent=1 // pred_check_branch
      %20 = sbr.rel (0) target = $region13
    $region12: #{tpu_custom_call.1} parent=1 // pred_region
      _
    $region13: #{tpu_custom_call.1} parent=1 // pred_fallthru
      _
    // Predicated region
    $region14: #{tpu_custom_call.1} parent=1 // pred_check
      _
    $region15: #{tpu_custom_call.1} parent=1 // pred_check_branch
      %22 = sbr.rel (0) target = $region17
    $region16: #{tpu_custom_call.1} parent=1 // pred_region
      _
    $region17: #{tpu_custom_call.1} parent=1 // pred_fallthru
      _
    // Predicated region
    $region18: #{tpu_custom_call.1} parent=1 // pred_check
      _
    $region19: #{tpu_custom_call.1} parent=1 // pred_check_branch
      %24 = sbr.rel (0) target = $region21
    $region20: #{tpu_custom_call.1} parent=1 // pred_region
      _
    $region21: #{tpu_custom_call.1} parent=1 // pred_fallthru
      _
    // Predicated region
    $region22: #{tpu_custom_call.1} parent=1 // pred_check
      _
    $region23: #{tpu_custom_call.1} parent=1 // pred_check_branch
      %26 = sbr.rel (0) target = $region25
    $region24: #{tpu_custom_call.1} parent=1 // pred_region
      _
    $region25: #{tpu_custom_call.1} parent=1 // pred_fallthru
      _
    // Predicated region
    $region26: #{tpu_custom_call.1} parent=1 // pred_check
      _
    $region27: #{tpu_custom_call.1} parent=1 // pred_check_branch
      %28 = sbr.rel (0) target = $region29
    $region28: #{tpu_custom_call.1} parent=1 // pred_region
      _
    $region29: #{tpu_custom_call.1} parent=1 // pred_fallthru
      _
    // Predicated region
    $region30: #{tpu_custom_call.1} parent=1 // pred_check
      _
    $region31: #{tpu_custom_call.1} parent=1 // pred_check_branch
      %30 = sbr.rel (0) target = $region33
    $region32: #{tpu_custom_call.1} parent=1 // pred_region
      _
    $region33: #{tpu_custom_call.1} parent=1 // pred_fallthru
      _
    // Predicated region
    $region34: #{tpu_custom_call.1} parent=1 // pred_check
      _
    $region35: #{tpu_custom_call.1} parent=1 // pred_check_branch
      %32 = sbr.rel (0) target = $region37
    $region36: #{tpu_custom_call.1} parent=1 // pred_region
      _
    $region37: #{tpu_custom_call.1} parent=1 // pred_fallthru
      _
    %v33 = vld [vmem:[%s0] sm:$0x3]
    %v34 = vld [vmem:[%s2] sm:$0xff]
    %v35 = vld [vmem:[%s1] sm:$0x3]
    %v36 = vld [vmem:[%s3] sm:$0xff]
    %v37 = vld [vmem:[%s3 + $0x8] sm:$0xf]
    %vm38 = vcmask 97280
    %v40 = vsel %vm38, %v35, 0
    %vm42 = vcmask 1043456
    %v44 = vsel %vm42, %v37, 0
    %46 = vmatprep.subr.mxu0 0.0
    %47 = vmatpush1.msra.mxu0 %v36
    %48 = vmatprep.subr.mxu0 0.0
    %49 = vmatpush1.msra.mxu0 %v44
    %50 = vmatprep.subr.mxu0 0.0
    %51 = vmatpush1.msra.mxu0 0.0
    %52 = vmatprep.subr.mxu0 0.0
    %53 = vmatpush1.msra.mxu0 0.0
    %54 = vmatprep.subr.mxu0 0.0
    %55 = vmatpush1.msra.mxu0 0.0
    %56 = vmatprep.subr.mxu0 0.0
    %57 = vmatpush1.msra.mxu0 0.0
    %58 = vmatprep.subr.mxu0 0.0
    %59 = vmatpush1.msra.mxu0 0.0
    %60 = vmatprep.subr.mxu0 0.0
    %61 = vmatpush1.msra.mxu0 0.0
    %62 = vmatprep.subr.mxu0 0.0
    %63 = vmatpush1.msra.mxu0 0.0
    %64 = vmatprep.subr.mxu0 0.0
    %65 = vmatpush1.msra.mxu0 0.0
    %66 = vmatprep.subr.mxu0 0.0
    %67 = vmatpush1.msra.mxu0 0.0
    %68 = vmatprep.subr.mxu0 0.0
    %69 = vmatpush1.msra.mxu0 0.0
    %70 = vmatprep.subr.mxu0 0.0
    %71 = vmatpush1.msra.mxu0 0.0
    %72 = vmatprep.subr.mxu0 0.0
    %73 = vmatpush1.msra.mxu0 0.0
    %74 = vmatprep.subr.mxu0 0.0
    %75 = vmatpush1.msra.mxu0 0.0
    %76 = vmatprep.subr.mxu0 0.0
    %77 = vmatpush1.msra.mxu0 0.0
    %78 = vmatprep.subr.mxu0 0.0
    %79 = vmatpush1.msra.mxu0 0.0
    %80 = vmatprep.subr.mxu0 0.0
    %81 = vmatpush1.msra.mxu0 0.0
    %82 = vmatprep.subr.mxu0 0.0
    %83 = vmatpush1.msra.mxu0 0.0
    %84 = vmatprep.subr.mxu0 0.0
    %85 = vmatpush1.msra.mxu0 0.0
    %86 = vmatprep.subr.mxu0 0.0
    %87 = vmatpush1.msra.mxu0 0.0
    %88 = vmatprep.subr.mxu0 0.0
    %89 = vmatpush1.msra.mxu0 0.0
    %90 = vmatprep.subr.mxu0 0.0
    %91 = vmatpush1.msra.mxu0 0.0
    %92 = vmatprep.subr.mxu0 0.0
    %93 = vmatpush1.msra.mxu0 0.0
    %94 = vmatprep.subr.mxu0 0.0
    %95 = vmatpush1.msra.mxu0 0.0
    %96 = vmatprep.subr.mxu0 0.0
    %97 = vmatpush1.msra.mxu0 0.0
    %98 = vmatprep.subr.mxu0 0.0
    %99 = vmatpush1.msra.mxu0 0.0
    %100 = vmatprep.subr.mxu0 0.0
    %101 = vmatpush1.msra.mxu0 0.0
    %102 = vmatprep.subr.mxu0 0.0
    %103 = vmatpush1.msra.mxu0 0.0
    %104 = vmatprep.subr.mxu0 0.0
    %105 = vmatpush1.msra.mxu0 0.0
    %106 = vmatprep.subr.mxu0 0.0
    %107 = vmatpush1.msra.mxu0 0.0
    %108 = vmatprep.subr.mxu0 0.0
    %109 = vmatpush1.msra.mxu0 0.0
    %110 = vmatprep.mubr.f32.mxu0 0.0
    %111 = vmatmul.mubr.f32.gmra.mrb[0].mxu0 %v40
    %v112 = vpop.f32.mrb[0].mxu0
    %v113 = vadd.f32 0.0, %v112
    %v114 = vpop.f32.mrb[0].mxu0
    %115 = vdwg.mxu0
    %vm116 = vcmask 64512
    %v118 = vsel %vm116, %v33, 0
    %120 = vmatprep.subr.mxu0 0.0
    %121 = vmatpush1.msra.mxu0 %v34
    %122 = vmatprep.subr.mxu0 0.0
    %123 = vmatpush1.msra.mxu0 0.0
    %124 = vmatprep.subr.mxu0 0.0
    %125 = vmatpush1.msra.mxu0 0.0
    %126 = vmatprep.subr.mxu0 0.0
    %127 = vmatpush1.msra.mxu0 0.0
    %128 = vmatprep.subr.mxu0 0.0
    %129 = vmatpush1.msra.mxu0 0.0
    %130 = vmatprep.subr.mxu0 0.0
    %131 = vmatpush1.msra.mxu0 0.0
    %132 = vmatprep.subr.mxu0 0.0
    %133 = vmatpush1.msra.mxu0 0.0
    %134 = vmatprep.subr.mxu0 0.0
    %135 = vmatpush1.msra.mxu0 0.0
    %136 = vmatprep.subr.mxu0 0.0
    %137 = vmatpush1.msra.mxu0 0.0
    %138 = vmatprep.subr.mxu0 0.0
    %139 = vmatpush1.msra.mxu0 0.0
    %140 = vmatprep.subr.mxu0 0.0
    %141 = vmatpush1.msra.mxu0 0.0
    %142 = vmatprep.subr.mxu0 0.0
    %143 = vmatpush1.msra.mxu0 0.0
    %144 = vmatprep.subr.mxu0 0.0
    %145 = vmatpush1.msra.mxu0 0.0
    %146 = vmatprep.subr.mxu0 0.0
    %147 = vmatpush1.msra.mxu0 0.0
    %148 = vmatprep.subr.mxu0 0.0
    %149 = vmatpush1.msra.mxu0 0.0
    %150 = vmatprep.subr.mxu0 0.0
    %151 = vmatpush1.msra.mxu0 0.0
    %152 = vmatprep.subr.mxu0 0.0
    %153 = vmatpush1.msra.mxu0 0.0
    %154 = vmatprep.subr.mxu0 0.0
    %155 = vmatpush1.msra.mxu0 0.0
    %156 = vmatprep.subr.mxu0 0.0
    %157 = vmatpush1.msra.mxu0 0.0
    %158 = vmatprep.subr.mxu0 0.0
    %159 = vmatpush1.msra.mxu0 0.0
    %160 = vmatprep.subr.mxu0 0.0
    %161 = vmatpush1.msra.mxu0 0.0
    %162 = vmatprep.subr.mxu0 0.0
    %163 = vmatpush1.msra.mxu0 0.0
    %164 = vmatprep.subr.mxu0 0.0
    %165 = vmatpush1.msra.mxu0 0.0
    %166 = vmatprep.subr.mxu0 0.0
    %167 = vmatpush1.msra.mxu0 0.0
    %168 = vmatprep.subr.mxu0 0.0
    %169 = vmatpush1.msra.mxu0 0.0
    %170 = vmatprep.subr.mxu0 0.0
    %171 = vmatpush1.msra.mxu0 0.0
    %172 = vmatprep.subr.mxu0 0.0
    %173 = vmatpush1.msra.mxu0 0.0
    %174 = vmatprep.subr.mxu0 0.0
    %175 = vmatpush1.msra.mxu0 0.0
    %176 = vmatprep.subr.mxu0 0.0
    %177 = vmatpush1.msra.mxu0 0.0
    %178 = vmatprep.subr.mxu0 0.0
    %179 = vmatpush1.msra.mxu0 0.0
    %180 = vmatprep.subr.mxu0 0.0
    %181 = vmatpush1.msra.mxu0 0.0
    %182 = vmatprep.subr.mxu0 0.0
    %183 = vmatpush1.msra.mxu0 0.0
    %184 = vmatprep.mubr.f32.mxu0 0.0
    %185 = vmatmul.mubr.f32.gmra.mrb[0].mxu0 %v118
    %v186 = vpop.f32.mrb[0].mxu0
    %v187 = vadd.f32 %v113, %v186
    %v188 = vpop.f32.mrb[0].mxu0
    %189 = vdwg.mxu0
    %v190 = vld [vmem:[%s4] sm:$0x1]
    %v192 = vlaneseq
    %v193 = vshrl.u32 %v192, 7
    %v194 = vsub.s32 0, %v193
    %v195 = vrot.slane %v190, %v194
    %v197 = vadd.f32 %v187, %v195
    %v198 = vmax.f32 %v197, 0.0
    %v199 = vld [vmem:[%s5] sm:$0xff]
    %v200 = vld [vmem:[%s5 + $0x8] sm:$0xff]
    %v201 = vld [vmem:[%s5 + $0x10] sm:$0xff]
    %v202 = vld [vmem:[%s5 + $0x18] sm:$0xff]
    %v203 = vld [vmem:[%s6] sm:$0x1]
    %v205 = vlaneseq
    %v206 = vshrl.u32 %v205, 7
    %v207 = vsub.s32 0, %v206
    %v208 = vrot.slane %v203, %v207
    %vm210 = vcmask 261120
    %v212 = vsel %vm210, %v198, 0
    %214 = vmatprep.subr.mxu0 0.0
    %215 = vmatpush1.msra.mxu0 %v199
    %216 = vmatprep.subr.mxu0 0.0
    %217 = vmatpush1.msra.mxu0 %v200
    %218 = vmatprep.subr.mxu0 0.0
    %219 = vmatpush1.msra.mxu0 %v201
    %220 = vmatprep.subr.mxu0 0.0
    %221 = vmatpush1.msra.mxu0 %v202
    %222 = vmatprep.subr.mxu0 0.0
    %223 = vmatpush1.msra.mxu0 0.0
    %224 = vmatprep.subr.mxu0 0.0
    %225 = vmatpush1.msra.mxu0 0.0
    %226 = vmatprep.subr.mxu0 0.0
    %227 = vmatpush1.msra.mxu0 0.0
    %228 = vmatprep.subr.mxu0 0.0
    %229 = vmatpush1.msra.mxu0 0.0
    %230 = vmatprep.subr.mxu0 0.0
    %231 = vmatpush1.msra.mxu0 0.0
    %232 = vmatprep.subr.mxu0 0.0
    %233 = vmatpush1.msra.mxu0 0.0
    %234 = vmatprep.subr.mxu0 0.0
    %235 = vmatpush1.msra.mxu0 0.0
    %236 = vmatprep.subr.mxu0 0.0
    %237 = vmatpush1.msra.mxu0 0.0
    %238 = vmatprep.subr.mxu0 0.0
    %239 = vmatpush1.msra.mxu0 0.0
    %240 = vmatprep.subr.mxu0 0.0
    %241 = vmatpush1.msra.mxu0 0.0
    %242 = vmatprep.subr.mxu0 0.0
    %243 = vmatpush1.msra.mxu0 0.0
    %244 = vmatprep.subr.mxu0 0.0
    %245 = vmatpush1.msra.mxu0 0.0
    %246 = vmatprep.subr.mxu0 0.0
    %247 = vmatpush1.msra.mxu0 0.0
    %248 = vmatprep.subr.mxu0 0.0
    %249 = vmatpush1.msra.mxu0 0.0
    %250 = vmatprep.subr.mxu0 0.0
    %251 = vmatpush1.msra.mxu0 0.0
    %252 = vmatprep.subr.mxu0 0.0
    %253 = vmatpush1.msra.mxu0 0.0
    %254 = vmatprep.subr.mxu0 0.0
    %255 = vmatpush1.msra.mxu0 0.0
    %256 = vmatprep.subr.mxu0 0.0
    %257 = vmatpush1.msra.mxu0 0.0
    %258 = vmatprep.subr.mxu0 0.0
    %259 = vmatpush1.msra.mxu0 0.0
    %260 = vmatprep.subr.mxu0 0.0
    %261 = vmatpush1.msra.mxu0 0.0
    %262 = vmatprep.subr.mxu0 0.0
    %263 = vmatpush1.msra.mxu0 0.0
    %264 = vmatprep.subr.mxu0 0.0
    %265 = vmatpush1.msra.mxu0 0.0
    %266 = vmatprep.subr.mxu0 0.0
    %267 = vmatpush1.msra.mxu0 0.0
    %268 = vmatprep.subr.mxu0 0.0
    %269 = vmatpush1.msra.mxu0 0.0
    %270 = vmatprep.subr.mxu0 0.0
    %271 = vmatpush1.msra.mxu0 0.0
    %272 = vmatprep.subr.mxu0 0.0
    %273 = vmatpush1.msra.mxu0 0.0
    %274 = vmatprep.subr.mxu0 0.0
    %275 = vmatpush1.msra.mxu0 0.0
    %276 = vmatprep.subr.mxu0 0.0
    %277 = vmatpush1.msra.mxu0 0.0
    %278 = vmatprep.mubr.f32.mxu0 0.0
    %279 = vmatmul.mubr.f32.gmra.mrb[0].mxu0 %v212
    %v280 = vpop.f32.mrb[0].mxu0
    %v281 = vadd.f32 %v208, %v280
    %v282 = vpop.f32.mrb[0].mxu0
    %283 = vdwg.mxu0
    %v284 = vmax.f32 %v281, 0.0
    %v285 = vld [vmem:[%s7] sm:$0xff]
    %v286 = vld [vmem:[%s7 + $0x8] sm:$0xff]
    %v287 = vld [vmem:[%s7 + $0x10] sm:$0xff]
    %v288 = vld [vmem:[%s7 + $0x18] sm:$0xff]
    %v289 = vld [vmem:[%s7 + $0x20] sm:$0xff]
    %v290 = vld [vmem:[%s7 + $0x28] sm:$0xff]
    %v291 = vld [vmem:[%s7 + $0x30] sm:$0xff]
    %v292 = vld [vmem:[%s7 + $0x38] sm:$0xff]
    %v293 = vld [vmem:[%s8] sm:$0x1]
    %v295 = vlaneseq
    %v296 = vshrl.u32 %v295, 7
    %v297 = vsub.s32 0, %v296
    %v298 = vrot.slane %v293, %v297
    %vm300 = vcmask 523264
    %v302 = vsel %vm300, %v284, 0
    %304 = vmatprep.subr.mxu0 0.0
    %305 = vmatpush1.msra.mxu0 %v285
    %306 = vmatprep.subr.mxu0 0.0
    %307 = vmatpush1.msra.mxu0 %v286
    %308 = vmatprep.subr.mxu0 0.0
    %309 = vmatpush1.msra.mxu0 %v287
    %310 = vmatprep.subr.mxu0 0.0
    %311 = vmatpush1.msra.mxu0 %v288
    %312 = vmatprep.subr.mxu0 0.0
    %313 = vmatpush1.msra.mxu0 %v289
    %314 = vmatprep.subr.mxu0 0.0
    %315 = vmatpush1.msra.mxu0 %v290
    %316 = vmatprep.subr.mxu0 0.0
    %317 = vmatpush1.msra.mxu0 %v291
    %318 = vmatprep.subr.mxu0 0.0
    %319 = vmatpush1.msra.mxu0 %v292
    %320 = vmatprep.subr.mxu0 0.0
    %321 = vmatpush1.msra.mxu0 0.0
    %322 = vmatprep.subr.mxu0 0.0
    %323 = vmatpush1.msra.mxu0 0.0
    %324 = vmatprep.subr.mxu0 0.0
    %325 = vmatpush1.msra.mxu0 0.0
    %326 = vmatprep.subr.mxu0 0.0
    %327 = vmatpush1.msra.mxu0 0.0
    %328 = vmatprep.subr.mxu0 0.0
    %329 = vmatpush1.msra.mxu0 0.0
    %330 = vmatprep.subr.mxu0 0.0
    %331 = vmatpush1.msra.mxu0 0.0
    %332 = vmatprep.subr.mxu0 0.0
    %333 = vmatpush1.msra.mxu0 0.0
    %334 = vmatprep.subr.mxu0 0.0
    %335 = vmatpush1.msra.mxu0 0.0
    %336 = vmatprep.subr.mxu0 0.0
    %337 = vmatpush1.msra.mxu0 0.0
    %338 = vmatprep.subr.mxu0 0.0
    %339 = vmatpush1.msra.mxu0 0.0
    %340 = vmatprep.subr.mxu0 0.0
    %341 = vmatpush1.msra.mxu0 0.0
    %342 = vmatprep.subr.mxu0 0.0
    %343 = vmatpush1.msra.mxu0 0.0
    %344 = vmatprep.subr.mxu0 0.0
    %345 = vmatpush1.msra.mxu0 0.0
    %346 = vmatprep.subr.mxu0 0.0
    %347 = vmatpush1.msra.mxu0 0.0
    %348 = vmatprep.subr.mxu0 0.0
    %349 = vmatpush1.msra.mxu0 0.0
    %350 = vmatprep.subr.mxu0 0.0
    %351 = vmatpush1.msra.mxu0 0.0
    %352 = vmatprep.subr.mxu0 0.0
    %353 = vmatpush1.msra.mxu0 0.0
    %354 = vmatprep.subr.mxu0 0.0
    %355 = vmatpush1.msra.mxu0 0.0
    %356 = vmatprep.subr.mxu0 0.0
    %357 = vmatpush1.msra.mxu0 0.0
    %358 = vmatprep.subr.mxu0 0.0
    %359 = vmatpush1.msra.mxu0 0.0
    %360 = vmatprep.subr.mxu0 0.0
    %361 = vmatpush1.msra.mxu0 0.0
    %362 = vmatprep.subr.mxu0 0.0
    %363 = vmatpush1.msra.mxu0 0.0
    %364 = vmatprep.subr.mxu0 0.0
    %365 = vmatpush1.msra.mxu0 0.0
    %366 = vmatprep.subr.mxu0 0.0
    %367 = vmatpush1.msra.mxu0 0.0
    %368 = vmatprep.mubr.f32.mxu0 0.0
    %369 = vmatmul.mubr.f32.gmra.mrb[0].mxu0 %v302
    %v370 = vpop.f32.mrb[0].mxu0
    %v371 = vadd.f32 %v298, %v370
    %v372 = vpop.f32.mrb[0].mxu0
    %373 = vdwg.mxu0
    %v374 = vmax.f32 %v371, 0.0
    %vm375 = vcmask 254976
    %376 = vst.msk [vmem:[#allocation2] sm:$0x3] %vm375, %v374
    // Predicated region
    $region38: #{tpu_custom_call.1} parent=1 // pred_check
      _
    $region39: #{tpu_custom_call.1} parent=1 // pred_check_branch
      %378 = sbr.rel (0) target = $region41
    $region40: #{tpu_custom_call.1} parent=1 // pred_region
      %s380 = ssub.s32 32, 32
      %381 = vsyncadd [#allocation3], %s380
      %s383 = sshll.u32 [#allocation2], 4
      %s384 = int_to_ptr.vmem [resolvable:$true] %s383
      %386 = dma.vmem_to_hbm [thread:$0]  %s384, 32, %s9, [#allocation3]
    $region41: #{tpu_custom_call.1} parent=1 // pred_fallthru
      _
    // Predicated region
    $region42: #{tpu_custom_call.1} parent=1 // pred_check
      _
    $region43: #{tpu_custom_call.1} parent=1 // pred_check_branch
      %388 = sbr.rel (0) target = $region45
    $region44: #{tpu_custom_call.1} parent=1 // pred_region
      %389 = dma.done [#allocation3], 32
    $region45: #{tpu_custom_call.1} parent=1 // pred_fallthru
      _
    %390 = vsyncpa [#allocation3], 1

</llo_original>
